<compile_context>
chip_gen: v7x
topology: tpu7x:2x2x1
jax: 0.10.0
libtpu: 0.0.40
codegen_flags: <defaults>
</compile_context>

<pallas_src>
import jax
import jax.numpy as jnp
from jax.experimental import pallas as pl
from jax.experimental.pallas import tpu as pltpu


def gcn_stack_kernel(adj_ref, x_ref, w_ref, b_ref, o_ref):
    num_layers = w_ref.shape[0]
    n = adj_ref.shape[0]

    # --- Symmetric GCN normalization, computed once in-kernel -------------
    # A_hat = D^-1/2 (A + I) D^-1/2.  Row sums go through the XLU lane-reduce,
    # column sums through the sublane-reduce; rsqrt goes to the EUP.
    a = adj_ref[...].astype(jnp.float32)
    row = jax.lax.broadcasted_iota(jnp.int32, (n, n), 0)
    col = jax.lax.broadcasted_iota(jnp.int32, (n, n), 1)
    a = a + (row == col).astype(jnp.float32)               # add self loops
    deg_row = jnp.sum(a, axis=1, keepdims=True)            # (n, 1)
    deg_col = jnp.sum(a, axis=0, keepdims=True)            # (1, n)
    a_hat = (a * jax.lax.rsqrt(deg_row) * jax.lax.rsqrt(deg_col)).astype(jnp.bfloat16)

    # --- Layer stack, statically unrolled ---------------------------------
    h = x_ref[...].astype(jnp.float32)                      # f32 carried state
    for l in range(num_layers):
        w = w_ref[l]                                         # (Hp, Hp) bf16
        b = b_ref[l]                                         # (1, Hp)  f32
        xw = jnp.dot(h.astype(jnp.bfloat16), w,
                     preferred_element_type=jnp.float32)     # (Np, Hp) f32
        y = jnp.dot(a_hat, xw.astype(jnp.bfloat16),
                    preferred_element_type=jnp.float32) + b  # (Np, Hp) f32
        if l < num_layers - 1:
            y = jnp.maximum(y, 0.0)                          # ReLU between layers only
        h = y

    o_ref[...] = h.astype(o_ref.dtype)                       # single final store


def paragraph_gnn_forward(x, adj, weights, biases):
    """x: [N, H] node features, adj: [N, N] (0/1 symmetric, no self loops),
    weights: [L, H, H] (in, out), biases: [L, 1, H]."""
    N, H = x.shape
    L = weights.shape[0]

    # Pad nodes to a multiple of 16 (bf16 sublane packing) and features to a
    # multiple of 128 lanes so all vector ops / the output store are dense.
    Np = pl.cdiv(N, 16) * 16
    Hp = pl.cdiv(H, 128) * 128

    x_p = jnp.zeros((Np, Hp), jnp.float32).at[:N, :H].set(x.astype(jnp.float32))
    adj_p = jnp.zeros((Np, Np), jnp.bfloat16).at[:N, :N].set(adj.astype(jnp.bfloat16))
    w_p = jnp.zeros((L, Hp, Hp), jnp.bfloat16).at[:, :H, :H].set(
        weights.astype(jnp.bfloat16))
    b_p = jnp.zeros((L, 1, Hp), jnp.float32).at[:, :, :H].set(
        biases.astype(jnp.float32))

    out = pl.pallas_call(
        gcn_stack_kernel,
        out_shape=jax.ShapeDtypeStruct((Np, Hp), x.dtype),
        in_specs=[pl.BlockSpec(memory_space=pltpu.MemorySpace.VMEM)] * 4,
        out_specs=pl.BlockSpec(memory_space=pltpu.MemorySpace.VMEM),
    )(adj_p, x_p, w_p, b_p)

    return out[:N, :H]


def _reference_gcn(x, adj, weights, biases):
    """Pure-JAX reference (f32 throughout) for a sanity check."""
    n = x.shape[0]
    a = adj.astype(jnp.float32) + jnp.eye(n, dtype=jnp.float32)
    d_inv_sqrt = jax.lax.rsqrt(jnp.sum(a, axis=1))
    a_hat = a * d_inv_sqrt[:, None] * d_inv_sqrt[None, :]
    h = x.astype(jnp.float32)
    L = weights.shape[0]
    for l in range(L):
        y = a_hat @ (h @ weights[l]) + biases[l]
        h = jnp.maximum(y, 0.0) if l < L - 1 else y
    return h


if __name__ == "__main__":
    hidden_dim = 32
    num_layers = 2
    num_nodes = 16  # paragraphs (graph nodes)

    key = jax.random.PRNGKey(0)
    kx, ka, kw = jax.random.split(key, 3)

    # Node features.
    x = jax.random.normal(kx, (num_nodes, hidden_dim), dtype=jnp.float32)

    # Random symmetric 0/1 adjacency without self loops.
    raw = jax.random.bernoulli(ka, p=0.3, shape=(num_nodes, num_nodes))
    adj = jnp.triu(raw.astype(jnp.float32), k=1)
    adj = adj + adj.T

    # Deterministic glorot-style init for each GCNConv's linear weight + zero bias.
    scale = jnp.sqrt(6.0 / (hidden_dim + hidden_dim))
    weights = jax.random.uniform(
        kw, (num_layers, hidden_dim, hidden_dim),
        minval=-scale, maxval=scale, dtype=jnp.float32)
    biases = jnp.zeros((num_layers, 1, hidden_dim), dtype=jnp.float32)

    out = paragraph_gnn_forward(x, adj, weights, biases)
    out = jax.block_until_ready(out)
    assert out.shape == (num_nodes, hidden_dim)

    # Loose-tolerance check vs. f32 reference (kernel feeds the MXU in bf16).
    ref = _reference_gcn(x, adj, weights, biases)
    assert jnp.allclose(out, ref, atol=0.15, rtol=0.15)

    print("KERNEL_OK")
</pallas_src>

<mosaic_0001>
module attributes {stable_mosaic.version = 11 : i64} {
  func.func @gcn_stack_kernel(%arg0: memref<16x16xbf16, #tpu.memory_space<vmem>>, %arg1: memref<16x128xf32, #tpu.memory_space<vmem>>, %arg2: memref<2x128x128xbf16, #tpu.memory_space<vmem>>, %arg3: memref<2x1x128xf32, #tpu.memory_space<vmem>>, %arg4: memref<16x128xf32, #tpu.memory_space<vmem>>) attributes {dimension_semantics = [], scalar_prefetch = 0 : i64, scratch_operands = 0 : i64, tpu.core_type = #tpu.core_type<tc>} {
    %c0 = arith.constant 0 : index
    %c0_0 = arith.constant 0 : index
    %0 = vector.load %arg0[%c0, %c0_0] : memref<16x16xbf16, #tpu.memory_space<vmem>>, vector<16x16xbf16>
    %1 = arith.extf %0 : vector<16x16xbf16> to vector<16x16xf32>
    %2 = tpu.iota {dimensions = array<i32: 0>} : vector<16x16xi32>
    %3 = tpu.iota {dimensions = array<i32: 1>} : vector<16x16xi32>
    %4 = arith.cmpi eq, %2, %3 : vector<16x16xi32>
    %5 = arith.extui %4 : vector<16x16xi1> to vector<16x16xi32>
    %6 = arith.sitofp %5 : vector<16x16xi32> to vector<16x16xf32>
    %7 = arith.addf %1, %6 : vector<16x16xf32>
    %cst = arith.constant dense<0.000000e+00> : vector<16xf32>
    %8 = vector.multi_reduction <add>, %7, %cst [1] : vector<16x16xf32> to vector<16xf32>
    %9 = vector.shape_cast %8 : vector<16xf32> to vector<16x1xf32>
    %cst_1 = arith.constant dense<0.000000e+00> : vector<16xf32>
    %10 = vector.multi_reduction <add>, %7, %cst_1 [0] : vector<16x16xf32> to vector<16xf32>
    %11 = vector.shape_cast %10 : vector<16xf32> to vector<1x16xf32>
    %12 = math.rsqrt %9 : vector<16x1xf32>
    %13 = vector.broadcast %12 : vector<16x1xf32> to vector<16x16xf32>
    %14 = arith.mulf %7, %13 : vector<16x16xf32>
    %15 = math.rsqrt %11 : vector<1x16xf32>
    %16 = vector.broadcast %15 : vector<1x16xf32> to vector<16x16xf32>
    %17 = arith.mulf %14, %16 : vector<16x16xf32>
    %18 = arith.truncf %17 : vector<16x16xf32> to vector<16x16xbf16>
    %c0_2 = arith.constant 0 : index
    %c0_3 = arith.constant 0 : index
    %19 = vector.load %arg1[%c0_2, %c0_3] : memref<16x128xf32, #tpu.memory_space<vmem>>, vector<16x128xf32>
    %c0_4 = arith.constant 0 : index
    %c0_5 = arith.constant 0 : index
    %c0_6 = arith.constant 0 : index
    %20 = vector.load %arg2[%c0_4, %c0_5, %c0_6] : memref<2x128x128xbf16, #tpu.memory_space<vmem>>, vector<1x128x128xbf16>
    %21 = vector.shape_cast %20 : vector<1x128x128xbf16> to vector<128x128xbf16>
    %c0_7 = arith.constant 0 : index
    %c0_8 = arith.constant 0 : index
    %c0_9 = arith.constant 0 : index
    %22 = vector.load %arg3[%c0_7, %c0_8, %c0_9] : memref<2x1x128xf32, #tpu.memory_space<vmem>>, vector<1x1x128xf32>
    %23 = vector.shape_cast %22 : vector<1x1x128xf32> to vector<1x128xf32>
    %24 = arith.truncf %19 : vector<16x128xf32> to vector<16x128xbf16>
    %cst_10 = arith.constant dense<0.000000e+00> : vector<16x128xf32>
    %25 = tpu.matmul %24, %21, %cst_10 {dimension_numbers = #tpu.dot_dimension_numbers<[1], [0], [0], [1], [0, 0, 1, 1], [], []>} : vector<16x128xbf16>, vector<128x128xbf16>, vector<16x128xf32> -> vector<16x128xf32>
    %26 = arith.truncf %25 : vector<16x128xf32> to vector<16x128xbf16>
    %cst_11 = arith.constant dense<0.000000e+00> : vector<16x128xf32>
    %27 = tpu.matmul %18, %26, %cst_11 {dimension_numbers = #tpu.dot_dimension_numbers<[1], [0], [0], [1], [0, 0, 1, 1], [], []>} : vector<16x16xbf16>, vector<16x128xbf16>, vector<16x128xf32> -> vector<16x128xf32>
    %28 = vector.broadcast %23 : vector<1x128xf32> to vector<16x128xf32>
    %29 = arith.addf %27, %28 : vector<16x128xf32>
    %cst_12 = arith.constant 0.000000e+00 : f32
    %30 = vector.broadcast %cst_12 : f32 to vector<16x128xf32>
    %31 = arith.maximumf %29, %30 : vector<16x128xf32>
    %c1 = arith.constant 1 : index
    %c0_13 = arith.constant 0 : index
    %c0_14 = arith.constant 0 : index
    %32 = vector.load %arg2[%c1, %c0_13, %c0_14] : memref<2x128x128xbf16, #tpu.memory_space<vmem>>, vector<1x128x128xbf16>
    %33 = vector.shape_cast %32 : vector<1x128x128xbf16> to vector<128x128xbf16>
    %c1_15 = arith.constant 1 : index
    %c0_16 = arith.constant 0 : index
    %c0_17 = arith.constant 0 : index
    %34 = vector.load %arg3[%c1_15, %c0_16, %c0_17] : memref<2x1x128xf32, #tpu.memory_space<vmem>>, vector<1x1x128xf32>
    %35 = vector.shape_cast %34 : vector<1x1x128xf32> to vector<1x128xf32>
    %36 = arith.truncf %31 : vector<16x128xf32> to vector<16x128xbf16>
    %cst_18 = arith.constant dense<0.000000e+00> : vector<16x128xf32>
    %37 = tpu.matmul %36, %33, %cst_18 {dimension_numbers = #tpu.dot_dimension_numbers<[1], [0], [0], [1], [0, 0, 1, 1], [], []>} : vector<16x128xbf16>, vector<128x128xbf16>, vector<16x128xf32> -> vector<16x128xf32>
    %38 = arith.truncf %37 : vector<16x128xf32> to vector<16x128xbf16>
    %cst_19 = arith.constant dense<0.000000e+00> : vector<16x128xf32>
    %39 = tpu.matmul %18, %38, %cst_19 {dimension_numbers = #tpu.dot_dimension_numbers<[1], [0], [0], [1], [0, 0, 1, 1], [], []>} : vector<16x16xbf16>, vector<16x128xbf16>, vector<16x128xf32> -> vector<16x128xf32>
    %40 = vector.broadcast %35 : vector<1x128xf32> to vector<16x128xf32>
    %41 = arith.addf %39, %40 : vector<16x128xf32>
    %c0_20 = arith.constant 0 : index
    %c0_21 = arith.constant 0 : index
    %42 = vector.load %arg4[%c0_20, %c0_21] : memref<16x128xf32, #tpu.memory_space<vmem>>, vector<16x128xf32>
    tpu.vector_store %arg4[%c0_20, %c0_21], %41 {strides = array<i32>} : memref<16x128xf32, #tpu.memory_space<vmem>>, vector<16x128xf32>,
    return
  }
}

</mosaic_0001>

<llo_original>
// kernel: tpu_custom_call.1
$region0: #{tpu_custom_call.1}
  #allocation0 [shape = 'u32[]', space=smem, size = 0x4, offset = 0x4, fixed_abs, tag = 'smem constant byte address 0x4 - core index']
  #allocation1 [shape = 'u32[144,128]{1,0:T(1,128)}', space=vmem, size = 0x12000, scoped, tag = 'internal scratch']
  %s0 = inlined_call_operand.hbm [shape: bf16[16,16], index: 0, kind: input, shape index: {}]
  %s1 = inlined_call_operand.hbm [shape: f32[16,128], index: 1, kind: input, shape index: {}]
  %s2 = inlined_call_operand.hbm [shape: bf16[2,128,128], index: 2, kind: input, shape index: {}]
  %s3 = inlined_call_operand.vmem [shape: f32[2,1,128], index: 3, kind: input, shape index: {}]
  %s4 = inlined_call_operand.hbm [shape: f32[16,128], index: 4, kind: output, shape index: {}]
  %s5 = sld [smem:[#allocation0]]
  $region38: #{tpu_custom_call.1} parent=0
    _
  %s7 = ssub.s32 1, %s5
  %s8 = scalar_select 0, %s7, %s5
  $region1: #{tpu_custom_call.1} parent=0
    #allocation2 [shape = 'u8[4096]{0}', space=vmem, size = 0x1000, scoped, tag = 'input window, operand 0, single buffered']
    #allocation3 [shape = 's32[1]{0}', space=sflag, size = 0x4, scoped, tag = 'scoped memory for tpu_custom_call.1']
    #allocation4 [shape = 's32[1]{0}', space=sflag, size = 0x4, scoped, tag = 'scoped memory for tpu_custom_call.1']
    #allocation5 [shape = 'u8[8192]{0}', space=vmem, size = 0x2000, scoped, tag = 'input window, operand 1, single buffered']
    #allocation6 [shape = 's32[1]{0}', space=sflag, size = 0x4, scoped, tag = 'scoped memory for tpu_custom_call.1']
    #allocation7 [shape = 'u8[65536]{0}', space=vmem, size = 0x10000, scoped, tag = 'input window, operand 2, single buffered']
    #allocation8 [shape = 'u8[8192]{0}', space=vmem, size = 0x2000, scoped, tag = 'output window, operand 0, single buffered']
    %9 = vsyncpa [#allocation3], 0
    %10 = vsyncpa [#allocation6], 0
    %11 = vsyncpa [#allocation4], 0
    // Predicated region
    $region2: #{tpu_custom_call.1} parent=1 // pred_check
      _
    $region3: #{tpu_custom_call.1} parent=1 // pred_check_branch
      %13 = sbr.rel (0) target = $region5
    $region4: #{tpu_custom_call.1} parent=1 // pred_region
      %s15 = ssub.s32 128, 128
      %16 = vsyncadd [#allocation3], %s15
      %s17 = sshll.u32 [#allocation2], 4
      %s18 = int_to_ptr.vmem [resolvable:$true] %s17
      %23 = dma.hbm_to_vmem [thread:$0]  %s0, 128, %s18, [#allocation3], 64, 64, 4
    $region5: #{tpu_custom_call.1} parent=1 // pred_fallthru
      _
    // Predicated region
    $region6: #{tpu_custom_call.1} parent=1 // pred_check
      _
    $region7: #{tpu_custom_call.1} parent=1 // pred_check_branch
      %25 = sbr.rel (0) target = $region9
    $region8: #{tpu_custom_call.1} parent=1 // pred_region
      %s27 = ssub.s32 256, 256
      %28 = vsyncadd [#allocation6], %s27
      %s29 = sshll.u32 [#allocation5], 4
      %s30 = int_to_ptr.vmem [resolvable:$true] %s29
      %35 = dma.hbm_to_vmem [thread:$0]  %s1, 256, %s30, [#allocation6], 128, 128, 8
    $region9: #{tpu_custom_call.1} parent=1 // pred_fallthru
      _
    // Predicated region
    $region10: #{tpu_custom_call.1} parent=1 // pred_check
      _
    $region11: #{tpu_custom_call.1} parent=1 // pred_check_branch
      %37 = sbr.rel (0) target = $region13
    $region12: #{tpu_custom_call.1} parent=1 // pred_region
      %s39 = ssub.s32 2048, 2048
      %40 = vsyncadd [#allocation6], %s39
      %s41 = sshll.u32 [#allocation7], 4
      %s42 = int_to_ptr.vmem [resolvable:$true] %s41
      %47 = dma.hbm_to_vmem [thread:$0]  %s2, 2048, %s42, [#allocation6], 64, 64, 4
    $region13: #{tpu_custom_call.1} parent=1 // pred_fallthru
      _
    // Predicated region
    $region14: #{tpu_custom_call.1} parent=1 // pred_check
      _
    $region15: #{tpu_custom_call.1} parent=1 // pred_check_branch
      %49 = sbr.rel (0) target = $region17
    $region16: #{tpu_custom_call.1} parent=1 // pred_region
      _
    $region17: #{tpu_custom_call.1} parent=1 // pred_fallthru
      _
    // Predicated region
    $region18: #{tpu_custom_call.1} parent=1 // pred_check
      _
    $region19: #{tpu_custom_call.1} parent=1 // pred_check_branch
      %51 = sbr.rel (0) target = $region21
    $region20: #{tpu_custom_call.1} parent=1 // pred_region
      %52 = dma.done [#allocation3], 128
    $region21: #{tpu_custom_call.1} parent=1 // pred_fallthru
      _
    // Predicated region
    $region22: #{tpu_custom_call.1} parent=1 // pred_check
      _
    $region23: #{tpu_custom_call.1} parent=1 // pred_check_branch
      %54 = sbr.rel (0) target = $region25
    $region24: #{tpu_custom_call.1} parent=1 // pred_region
      %55 = dma.done [#allocation6], 256
    $region25: #{tpu_custom_call.1} parent=1 // pred_fallthru
      _
    // Predicated region
    $region26: #{tpu_custom_call.1} parent=1 // pred_check
      _
    $region27: #{tpu_custom_call.1} parent=1 // pred_check_branch
      %57 = sbr.rel (0) target = $region29
    $region28: #{tpu_custom_call.1} parent=1 // pred_region
      %58 = dma.done [#allocation6], 2048
    $region29: #{tpu_custom_call.1} parent=1 // pred_fallthru
      _
    %v60 = vld [vmem:[#allocation2] sm:$0xf]
    %v61 = vld [vmem:[#allocation2 + $0x4] sm:$0xf]
    %v62 = vunpack.c.l.bf16 %v60
    %v63 = vunpack.c.l.bf16 %v61
    %v64 = vlaneseq
    %v65 = vshrl.u32 %v64, 7
    %v66 = vadd.s32 %v65, 8
    %v67 = vlaneseq
    %v68 = vand.u32 %v67, 127
    %vm69 = vcmp.eq.s32.totalorder %v65, %v68
    %vm70 = vcmp.eq.s32.totalorder %v66, %v68
    %v71 = vsel %vm69, 1, 0
    %v72 = vsel %vm70, 1, 0
    %v73 = vcvt.s32.f32 %v71
    %v74 = vcvt.s32.f32 %v72
    %v75 = vadd.f32 %v62, %v73
    %v76 = vadd.f32 %v63, %v74
    %vm77 = vcmask 130048
    %v78 = vsel %vm77, %v75, 0.0
    %79 = vadd.xlane.f32.xlu0 %v78
    %v80 = vpop.xlane.xlu0 %79
    %v81 = vsel %vm77, %v76, 0.0
    %82 = vadd.xlane.f32.xlu0 %v81
    %v83 = vpop.xlane.xlu0 %82
    %v84 = vadd.f32 %v78, %v81
    %v85 = vrot.slane %v84, 4
    %v86 = vadd.f32 %v84, %v85
    %v87 = vrot.slane %v86, 2
    %v88 = vadd.f32 %v86, %v87
    %v89 = vrot.slane %v88, 1
    %v90 = vadd.f32 %v88, %v89
    %v91 = vrsqrt.pop %v80
    %v92 = vrsqrt.pop %v83
    %v93 = vmul.f32 %v75, %v91
    %v94 = vmul.f32 %v76, %v92
    %v95 = vrsqrt.pop %v90
    %v96 = vmul.f32 %v93, %v95
    %v97 = vmul.f32 %v94, %v95
    %v98 = vpack.c.bf16 %v97, %v96
    %v99 = vld [vmem:[#allocation5] sm:$0xff]
    %v100 = vld [vmem:[#allocation5 + $0x8] sm:$0xff]
    %v101 = vld [vmem:[#allocation7] sm:$0xf]
    %v102 = vld [vmem:[#allocation7 + $0x4] sm:$0xf]
    %v103 = vld [vmem:[#allocation7 + $0x8] sm:$0xf]
    %v104 = vld [vmem:[#allocation7 + $0xc] sm:$0xf]
    %v105 = vld [vmem:[#allocation7 + $0x10] sm:$0xf]
    %v106 = vld [vmem:[#allocation7 + $0x14] sm:$0xf]
    %v107 = vld [vmem:[#allocation7 + $0x18] sm:$0xf]
    %v108 = vld [vmem:[#allocation7 + $0x1c] sm:$0xf]
    %v109 = vld [vmem:[#allocation7 + $0x20] sm:$0xf]
    %v110 = vld [vmem:[#allocation7 + $0x24] sm:$0xf]
    %v111 = vld [vmem:[#allocation7 + $0x28] sm:$0xf]
    %v112 = vld [vmem:[#allocation7 + $0x2c] sm:$0xf]
    %v113 = vld [vmem:[#allocation7 + $0x30] sm:$0xf]
    %v114 = vld [vmem:[#allocation7 + $0x34] sm:$0xf]
    %v115 = vld [vmem:[#allocation7 + $0x38] sm:$0xf]
    %v116 = vld [vmem:[#allocation7 + $0x3c] sm:$0xf]
    %v117 = vld [vmem:[%s3] sm:$0x1]
    %v118 = vpack.c.bf16 %v100, %v99
    %v135 = vunpack.c.l.b16 %v101
    %v136 = vunpack.c.l.b16 %v102
    %v137 = vunpack.c.l.b16 %v103
    %v138 = vunpack.c.l.b16 %v104
    %v139 = vunpack.c.l.b16 %v105
    %v140 = vunpack.c.l.b16 %v106
    %v141 = vunpack.c.l.b16 %v107
    %v142 = vunpack.c.l.b16 %v108
    %v143 = vunpack.c.l.b16 %v109
    %v144 = vunpack.c.l.b16 %v110
    %v145 = vunpack.c.l.b16 %v111
    %v146 = vunpack.c.l.b16 %v112
    %v147 = vunpack.c.l.b16 %v113
    %v148 = vunpack.c.l.b16 %v114
    %v149 = vunpack.c.l.b16 %v115
    %v150 = vunpack.c.l.b16 %v116
    %v151 = vpack.c.b16 %v136, %v135
    %v152 = vpack.c.b16 %v138, %v137
    %v153 = vpack.c.b16 %v140, %v139
    %v154 = vpack.c.b16 %v142, %v141
    %v155 = vpack.c.b16 %v144, %v143
    %v156 = vpack.c.b16 %v146, %v145
    %v157 = vpack.c.b16 %v148, %v147
    %v158 = vpack.c.b16 %v150, %v149
    %167 = vmatprep.subr.bf16.mxu0 0
    %168 = vmatpush1.bf16.msra.mxu0 %v151
    %169 = vmatprep.subr.bf16.mxu0 0
    %170 = vmatpush1.bf16.msra.mxu0 %v152
    %171 = vmatprep.subr.bf16.mxu0 0
    %172 = vmatpush1.bf16.msra.mxu0 %v153
    %173 = vmatprep.subr.bf16.mxu0 0
    %174 = vmatpush1.bf16.msra.mxu0 %v154
    %175 = vmatprep.subr.bf16.mxu0 0
    %176 = vmatpush1.bf16.msra.mxu0 %v155
    %177 = vmatprep.subr.bf16.mxu0 0
    %178 = vmatpush1.bf16.msra.mxu0 %v156
    %179 = vmatprep.subr.bf16.mxu0 0
    %180 = vmatpush1.bf16.msra.mxu0 %v157
    %181 = vmatprep.subr.bf16.mxu0 0
    %182 = vmatpush1.bf16.msra.mxu0 %v158
    %183 = vmatprep.subr.bf16.mxu0 0
    %184 = vmatpush1.bf16.msra.mxu0 0
    %185 = vmatprep.subr.bf16.mxu0 0
    %186 = vmatpush1.bf16.msra.mxu0 0
    %187 = vmatprep.subr.bf16.mxu0 0
    %188 = vmatpush1.bf16.msra.mxu0 0
    %189 = vmatprep.subr.bf16.mxu0 0
    %190 = vmatpush1.bf16.msra.mxu0 0
    %191 = vmatprep.subr.bf16.mxu0 0
    %192 = vmatpush1.bf16.msra.mxu0 0
    %193 = vmatprep.subr.bf16.mxu0 0
    %194 = vmatpush1.bf16.msra.mxu0 0
    %195 = vmatprep.subr.bf16.mxu0 0
    %196 = vmatpush1.bf16.msra.mxu0 0
    %197 = vmatprep.subr.bf16.mxu0 0
    %198 = vmatpush1.bf16.msra.mxu0 0
    %199 = vmatprep.mubr.bf16.mxu0 0
    %200 = vmatmul.mubr.bf16.gmra.mrb[0].mxu0 %v118
    %v201 = vpop.f32.mrb[0].mxu0
    %v202 = vadd.f32 0.0, %v201
    %v203 = vpop.f32.mrb[0].mxu0
    %v204 = vpop.f32.mrb[0].mxu0
    %v205 = vadd.f32 0.0, %v204
    %v206 = vpop.f32.mrb[0].mxu0
    %207 = vdwg.mxu0
    %v208 = vpack.c.bf16 %v205, %v202
    %v210 = vlaneseq
    %v211 = vshrl.u32 %v210, 7
    %v212 = vsub.s32 0, %v211
    %v213 = vrot.slane %v117, %v212
    %v216 = vsel %vm77, %v98, 0
    %218 = vmatprep.subr.bf16.mxu0 0
    %219 = vmatpush1.bf16.msra.mxu0 %v208
    %220 = vmatprep.subr.bf16.mxu0 0
    %221 = vmatpush1.bf16.msra.mxu0 0
    %222 = vmatprep.subr.bf16.mxu0 0
    %223 = vmatpush1.bf16.msra.mxu0 0
    %224 = vmatprep.subr.bf16.mxu0 0
    %225 = vmatpush1.bf16.msra.mxu0 0
    %226 = vmatprep.subr.bf16.mxu0 0
    %227 = vmatpush1.bf16.msra.mxu0 0
    %228 = vmatprep.subr.bf16.mxu0 0
    %229 = vmatpush1.bf16.msra.mxu0 0
    %230 = vmatprep.subr.bf16.mxu0 0
    %231 = vmatpush1.bf16.msra.mxu0 0
    %232 = vmatprep.subr.bf16.mxu0 0
    %233 = vmatpush1.bf16.msra.mxu0 0
    %234 = vmatprep.subr.bf16.mxu0 0
    %235 = vmatpush1.bf16.msra.mxu0 0
    %236 = vmatprep.subr.bf16.mxu0 0
    %237 = vmatpush1.bf16.msra.mxu0 0
    %238 = vmatprep.subr.bf16.mxu0 0
    %239 = vmatpush1.bf16.msra.mxu0 0
    %240 = vmatprep.subr.bf16.mxu0 0
    %241 = vmatpush1.bf16.msra.mxu0 0
    %242 = vmatprep.subr.bf16.mxu0 0
    %243 = vmatpush1.bf16.msra.mxu0 0
    %244 = vmatprep.subr.bf16.mxu0 0
    %245 = vmatpush1.bf16.msra.mxu0 0
    %246 = vmatprep.subr.bf16.mxu0 0
    %247 = vmatpush1.bf16.msra.mxu0 0
    %248 = vmatprep.subr.bf16.mxu0 0
    %249 = vmatpush1.bf16.msra.mxu0 0
    %250 = vmatprep.mubr.bf16.mxu0 0
    %251 = vmatmul.mubr.bf16.gmra.mrb[0].mxu0 %v216
    %v252 = vpop.f32.mrb[0].mxu0
    %v253 = vadd.f32 %v213, %v252
    %v254 = vpop.f32.mrb[0].mxu0
    %v255 = vpop.f32.mrb[0].mxu0
    %v256 = vadd.f32 %v213, %v255
    %v257 = vpop.f32.mrb[0].mxu0
    %258 = vdwg.mxu0
    %v259 = vmax.f32 %v253, 0.0
    %v260 = vmax.f32 %v256, 0.0
    %s261 = scalar_lea.vmem [#allocation7], 64
    %v262 = vld [vmem:[%s261] sm:$0xf]
    %v263 = vld [vmem:[%s261 + $0x4] sm:$0xf]
    %v264 = vld [vmem:[%s261 + $0x8] sm:$0xf]
    %v265 = vld [vmem:[%s261 + $0xc] sm:$0xf]
    %v266 = vld [vmem:[%s261 + $0x10] sm:$0xf]
    %v267 = vld [vmem:[%s261 + $0x14] sm:$0xf]
    %v268 = vld [vmem:[%s261 + $0x18] sm:$0xf]
    %v269 = vld [vmem:[%s261 + $0x1c] sm:$0xf]
    %v270 = vld [vmem:[%s261 + $0x20] sm:$0xf]
    %v271 = vld [vmem:[%s261 + $0x24] sm:$0xf]
    %v272 = vld [vmem:[%s261 + $0x28] sm:$0xf]
    %v273 = vld [vmem:[%s261 + $0x2c] sm:$0xf]
    %v274 = vld [vmem:[%s261 + $0x30] sm:$0xf]
    %v275 = vld [vmem:[%s261 + $0x34] sm:$0xf]
    %v276 = vld [vmem:[%s261 + $0x38] sm:$0xf]
    %v277 = vld [vmem:[%s261 + $0x3c] sm:$0xf]
    %s278 = scalar_lea.vmem %s3, 1
    %v279 = vld [vmem:[%s278] sm:$0x1]
    %v280 = vpack.c.bf16 %v260, %v259
    %v297 = vunpack.c.l.b16 %v262
    %v298 = vunpack.c.l.b16 %v263
    %v299 = vunpack.c.l.b16 %v264
    %v300 = vunpack.c.l.b16 %v265
    %v301 = vunpack.c.l.b16 %v266
    %v302 = vunpack.c.l.b16 %v267
    %v303 = vunpack.c.l.b16 %v268
    %v304 = vunpack.c.l.b16 %v269
    %v305 = vunpack.c.l.b16 %v270
    %v306 = vunpack.c.l.b16 %v271
    %v307 = vunpack.c.l.b16 %v272
    %v308 = vunpack.c.l.b16 %v273
    %v309 = vunpack.c.l.b16 %v274
    %v310 = vunpack.c.l.b16 %v275
    %v311 = vunpack.c.l.b16 %v276
    %v312 = vunpack.c.l.b16 %v277
    %v313 = vpack.c.b16 %v298, %v297
    %v314 = vpack.c.b16 %v300, %v299
    %v315 = vpack.c.b16 %v302, %v301
    %v316 = vpack.c.b16 %v304, %v303
    %v317 = vpack.c.b16 %v306, %v305
    %v318 = vpack.c.b16 %v308, %v307
    %v319 = vpack.c.b16 %v310, %v309
    %v320 = vpack.c.b16 %v312, %v311
    %329 = vmatprep.subr.bf16.mxu0 0
    %330 = vmatpush1.bf16.msra.mxu0 %v313
    %331 = vmatprep.subr.bf16.mxu0 0
    %332 = vmatpush1.bf16.msra.mxu0 %v314
    %333 = vmatprep.subr.bf16.mxu0 0
    %334 = vmatpush1.bf16.msra.mxu0 %v315
    %335 = vmatprep.subr.bf16.mxu0 0
    %336 = vmatpush1.bf16.msra.mxu0 %v316
    %337 = vmatprep.subr.bf16.mxu0 0
    %338 = vmatpush1.bf16.msra.mxu0 %v317
    %339 = vmatprep.subr.bf16.mxu0 0
    %340 = vmatpush1.bf16.msra.mxu0 %v318
    %341 = vmatprep.subr.bf16.mxu0 0
    %342 = vmatpush1.bf16.msra.mxu0 %v319
    %343 = vmatprep.subr.bf16.mxu0 0
    %344 = vmatpush1.bf16.msra.mxu0 %v320
    %345 = vmatprep.subr.bf16.mxu0 0
    %346 = vmatpush1.bf16.msra.mxu0 0
    %347 = vmatprep.subr.bf16.mxu0 0
    %348 = vmatpush1.bf16.msra.mxu0 0
    %349 = vmatprep.subr.bf16.mxu0 0
    %350 = vmatpush1.bf16.msra.mxu0 0
    %351 = vmatprep.subr.bf16.mxu0 0
    %352 = vmatpush1.bf16.msra.mxu0 0
    %353 = vmatprep.subr.bf16.mxu0 0
    %354 = vmatpush1.bf16.msra.mxu0 0
    %355 = vmatprep.subr.bf16.mxu0 0
    %356 = vmatpush1.bf16.msra.mxu0 0
    %357 = vmatprep.subr.bf16.mxu0 0
    %358 = vmatpush1.bf16.msra.mxu0 0
    %359 = vmatprep.subr.bf16.mxu0 0
    %360 = vmatpush1.bf16.msra.mxu0 0
    %361 = vmatprep.mubr.bf16.mxu0 0
    %362 = vmatmul.mubr.bf16.gmra.mrb[0].mxu0 %v280
    %v363 = vpop.f32.mrb[0].mxu0
    %v364 = vadd.f32 0.0, %v363
    %v365 = vpop.f32.mrb[0].mxu0
    %v366 = vpop.f32.mrb[0].mxu0
    %v367 = vadd.f32 0.0, %v366
    %v368 = vpop.f32.mrb[0].mxu0
    %369 = vdwg.mxu0
    %v370 = vpack.c.bf16 %v367, %v364
    %v372 = vlaneseq
    %v373 = vshrl.u32 %v372, 7
    %v374 = vsub.s32 0, %v373
    %v375 = vrot.slane %v279, %v374
    %377 = vmatprep.subr.bf16.mxu0 0
    %378 = vmatpush1.bf16.msra.mxu0 %v370
    %379 = vmatprep.subr.bf16.mxu0 0
    %380 = vmatpush1.bf16.msra.mxu0 0
    %381 = vmatprep.subr.bf16.mxu0 0
    %382 = vmatpush1.bf16.msra.mxu0 0
    %383 = vmatprep.subr.bf16.mxu0 0
    %384 = vmatpush1.bf16.msra.mxu0 0
    %385 = vmatprep.subr.bf16.mxu0 0
    %386 = vmatpush1.bf16.msra.mxu0 0
    %387 = vmatprep.subr.bf16.mxu0 0
    %388 = vmatpush1.bf16.msra.mxu0 0
    %389 = vmatprep.subr.bf16.mxu0 0
    %390 = vmatpush1.bf16.msra.mxu0 0
    %391 = vmatprep.subr.bf16.mxu0 0
    %392 = vmatpush1.bf16.msra.mxu0 0
    %393 = vmatprep.subr.bf16.mxu0 0
    %394 = vmatpush1.bf16.msra.mxu0 0
    %395 = vmatprep.subr.bf16.mxu0 0
    %396 = vmatpush1.bf16.msra.mxu0 0
    %397 = vmatprep.subr.bf16.mxu0 0
    %398 = vmatpush1.bf16.msra.mxu0 0
    %399 = vmatprep.subr.bf16.mxu0 0
    %400 = vmatpush1.bf16.msra.mxu0 0
    %401 = vmatprep.subr.bf16.mxu0 0
    %402 = vmatpush1.bf16.msra.mxu0 0
    %403 = vmatprep.subr.bf16.mxu0 0
    %404 = vmatpush1.bf16.msra.mxu0 0
    %405 = vmatprep.subr.bf16.mxu0 0
    %406 = vmatpush1.bf16.msra.mxu0 0
    %407 = vmatprep.subr.bf16.mxu0 0
    %408 = vmatpush1.bf16.msra.mxu0 0
    %409 = vmatprep.mubr.bf16.mxu0 0
    %410 = vmatmul.mubr.bf16.gmra.mrb[0].mxu0 %v216
    %v411 = vpop.f32.mrb[0].mxu0
    %v412 = vadd.f32 %v375, %v411
    %v413 = vpop.f32.mrb[0].mxu0
    %v414 = vpop.f32.mrb[0].mxu0
    %v415 = vadd.f32 %v375, %v414
    %v416 = vpop.f32.mrb[0].mxu0
    %417 = vdwg.mxu0
    %418 = vst [vmem:[#allocation8] sm:$0xff] %v412
    %419 = vst [vmem:[#allocation8 + $0x8] sm:$0xff] %v415
    // Predicated region
    $region30: #{tpu_custom_call.1} parent=1 // pred_check
      _
    $region31: #{tpu_custom_call.1} parent=1 // pred_check_branch
      %421 = sbr.rel (0) target = $region33
    $region32: #{tpu_custom_call.1} parent=1 // pred_region
      %s423 = ssub.s32 256, 256
      %424 = vsyncadd [#allocation4], %s423
      %s425 = sshll.u32 [#allocation8], 4
      %s426 = int_to_ptr.vmem [resolvable:$true] %s425
      %431 = dma.vmem_to_hbm [thread:$0]  %s426, 256, %s4, [#allocation4], 128, 128, 8
    $region33: #{tpu_custom_call.1} parent=1 // pred_fallthru
      _
    // Predicated region
    $region34: #{tpu_custom_call.1} parent=1 // pred_check
      _
    $region35: #{tpu_custom_call.1} parent=1 // pred_check_branch
      %433 = sbr.rel (0) target = $region37
    $region36: #{tpu_custom_call.1} parent=1 // pred_region
      %434 = dma.done [#allocation4], 256
    $region37: #{tpu_custom_call.1} parent=1 // pred_fallthru
      _
    %435 = vsyncpa [#allocation3], 1
    %436 = vsyncpa [#allocation6], 1
    %437 = vsyncpa [#allocation4], 1

</llo_original>
